<compile_context>
chip_gen: v7x
topology: tpu7x:2x2x1
jax: 0.10.0
libtpu: 0.0.40
codegen_flags: <defaults>
</compile_context>

<pallas_src>
import functools

import jax
import jax.numpy as jnp
from jax.experimental import pallas as pl
from jax.experimental.pallas import tpu as pltpu


LANE = 128   # lane width: feature dims padded to multiples of 128
SUB = 16     # sublane granularity legal for both f32 and bf16 tiles


def _round_up(x, m):
    return ((x + m - 1) // m) * m


def _chip_info():
    """Returns (vmem_capacity_bytes, is_v7x, is_v5e) with conservative fallbacks."""
    kind = ""
    try:
        kind = jax.devices()[0].device_kind.lower()
    except Exception:
        pass
    is_v7x = ("v7" in kind) or ("7x" in kind)
    is_v5e = ("v5e" in kind) or ("v5 lite" in kind) or ("v5litepod" in kind)
    vmem_cap = None
    try:
        vmem_cap = int(pltpu.get_tpu_info().vmem_capacity_bytes)
    except Exception:
        vmem_cap = None
    if vmem_cap is None:
        vmem_cap = (64 if is_v7x else 128) * 1024 * 1024
    return vmem_cap, is_v7x, is_v5e


def _pad_cast(a, shape, dtype):
    """Cast to dtype and zero-pad up to `shape` (no-op copy path if aligned)."""
    a = a.astype(dtype)
    if a.shape == tuple(shape):
        return a
    idx = tuple(slice(0, s) for s in a.shape)
    return jnp.zeros(shape, dtype).at[idx].set(a)


def mlp_kernel(x_ref, w1_ref, b1_ref, w2_ref, b2_ref, o_ref, acc_ref):
    """One (batch-tile, hidden-tile) grid step of relu(x@W1+b1)@W2+b2."""
    j = pl.program_id(1)

    @pl.when(j == 0)
    def _init():
        acc_ref[...] = jnp.zeros_like(acc_ref)

    # First dense on this hidden chunk: (tm, nin_p) @ (nin_p, th) -> f32 on MXU.
    h = jnp.dot(x_ref[...], w1_ref[...], preferred_element_type=jnp.float32)
    # Bias + ReLU epilogue in b1's dtype (bf16 on v6e/v7x, f32 on v5e).
    h = jnp.maximum(h.astype(b1_ref.dtype) + b1_ref[...], 0.0)
    # Second dense partial product, accumulated in f32 scratch.
    acc_ref[...] += jnp.dot(h.astype(w2_ref.dtype), w2_ref[...],
                            preferred_element_type=jnp.float32)

    @pl.when(j == pl.num_programs(1) - 1)
    def _finalize():
        o_ref[...] = (acc_ref[...] + b2_ref[...]).astype(o_ref.dtype)


def make_mlp(w1, b1, w2, b2, *, tm=None, th=512, compute_dtype=jnp.bfloat16):
    """Prepares (pads/casts) the weights once and returns a jitted forward(x).

    w1: (nin, nhid); b1: (nhid,); w2: (nhid, nout); b2: (nout,).
    forward(x) accepts x of shape (..., nin) and returns (..., nout) in x.dtype.
    """
    nin, nhid = w1.shape
    nout = w2.shape[1]
    vmem_cap, is_v7x, is_v5e = _chip_info()

    cdt = jnp.dtype(compute_dtype)
    # bf16 bias-add/ReLU only where the VPU has bf16 (v6e/v7x); f32 on v5e.
    epi_dtype = jnp.dtype(jnp.float32) if (is_v5e or cdt == jnp.dtype(jnp.float32)) else cdt

    nin_p = _round_up(nin, LANE)
    nout_p = _round_up(nout, LANE)
    th_p = _round_up(min(th, _round_up(nhid, LANE)), LANE)
    nhid_p = _round_up(nhid, th_p)
    n_h = nhid_p // th_p

    # One-time weight preparation (hoisted out of the per-call path).
    w1p = _pad_cast(w1, (nin_p, nhid_p), cdt)
    w2p = _pad_cast(w2, (nhid_p, nout_p), cdt)
    b1p = _pad_cast(b1.reshape(1, -1), (1, nhid_p), epi_dtype)
    b2p = _pad_cast(b2.reshape(1, -1), (1, nout_p), jnp.float32)

    cb = cdt.itemsize
    eb = jnp.dtype(epi_dtype).itemsize
    default_tm = 256 if is_v7x else 512

    def fwd(x):
        out_dtype = x.dtype
        ob = jnp.dtype(out_dtype).itemsize
        lead_shape = x.shape[:-1]
        x2 = x.reshape(-1, nin)
        B = x2.shape[0]

        # Batch tile: multiple of 16 sublanes, never larger than the padded batch.
        tm_ = tm if tm is not None else default_tm
        tm_ = max(SUB, min(_round_up(tm_, SUB), _round_up(B, SUB)))
        B_p = _round_up(B, tm_)
        if is_v7x:
            # Only v7x has 2 TensorCores to shard the parallel batch axis across.
            while B_p // tm_ < 2 and tm_ >= 2 * SUB and (tm_ // 2) % SUB == 0:
                tm_ //= 2
                B_p = _round_up(B, tm_)
        n_b = B_p // tm_

        # Pad the activations (skipped when already aligned).
        if B_p == B and nin_p == nin:
            xp = x2.astype(cdt)
        else:
            xp = jnp.zeros((B_p, nin_p), cdt).at[:B, :nin].set(x2.astype(cdt))

        # VMEM budget: double-buffered tiles + f32 accumulator + h intermediates
        # (f32 matmul result, epilogue copy, bf16 copy for the second matmul).
        vmem_need = (
            2 * tm_ * nin_p * cb             # x tiles
            + 2 * nin_p * th_p * cb          # w1 tiles
            + 2 * th_p * eb                  # b1 tiles
            + 2 * th_p * nout_p * cb         # w2 tiles
            + 2 * nout_p * 4                 # b2 tiles
            + 2 * tm_ * nout_p * ob          # out tiles
            + tm_ * nout_p * 4               # f32 accumulator scratch
            + tm_ * th_p * (4 + eb + cb)     # h intermediates
        )
        vmem_budget = (vmem_cap * 3) // 4    # ~48 MiB on v7x, ~96 MiB on v5e/v6e
        vmem_limit = int(min(max(vmem_need * 5 // 4, 16 * 1024 * 1024), vmem_budget))
        # TODO(synk): if vmem_need exceeds vmem_budget, shrink tm/th instead of
        # relying on the compiler; and consider pipeline_mode=pl.Buffered(3) on
        # the w1/w2 specs when the per-hidden-step compute is short vs. DMA.

        cost = pl.CostEstimate(
            flops=2 * B_p * nin_p * nhid_p + 2 * B_p * nhid_p * nout_p,
            transcendentals=0,
            bytes_accessed=(B_p * nin_p * cb
                            + n_b * (nin_p * nhid_p + nhid_p * nout_p) * cb
                            + nhid_p * eb + nout_p * 4
                            + B_p * nout_p * ob),
        )

        out_p = pl.pallas_call(
            mlp_kernel,
            out_shape=jax.ShapeDtypeStruct((B_p, nout_p), out_dtype),
            grid_spec=pltpu.PrefetchScalarGridSpec(
                num_scalar_prefetch=0,
                grid=(n_b, n_h),
                in_specs=[
                    pl.BlockSpec((tm_, nin_p), lambda i, j: (i, 0)),    # x
                    pl.BlockSpec((nin_p, th_p), lambda i, j: (0, j)),   # w1
                    pl.BlockSpec((1, th_p), lambda i, j: (0, j)),       # b1
                    pl.BlockSpec((th_p, nout_p), lambda i, j: (j, 0)),  # w2
                    pl.BlockSpec((1, nout_p), lambda i, j: (0, 0)),     # b2
                ],
                out_specs=pl.BlockSpec((tm_, nout_p), lambda i, j: (i, 0)),
                scratch_shapes=[pltpu.VMEM((tm_, nout_p), jnp.float32)],
            ),
            compiler_params=pltpu.CompilerParams(
                dimension_semantics=("parallel", "arbitrary"),
                vmem_limit_bytes=vmem_limit),
            cost_estimate=cost,
        )(xp, w1p, b1p, w2p, b2p)

        out = out_p if (B_p == B and nout_p == nout) else out_p[:B, :nout]
        return out.reshape(*lead_shape, nout)

    return jax.jit(fwd)


def mlp_forward(x, w1, b1, w2, b2, **kwargs):
    """Convenience one-shot wrapper (prefer make_mlp for repeated calls)."""
    return make_mlp(w1, b1, w2, b2, **kwargs)(x)


def _init_linear(key, fan_in, fan_out, dtype=jnp.float32):
    # Deterministic init mirroring torch.nn.Linear's uniform(-1/sqrt(fan_in), ...).
    kw, kb = jax.random.split(key)
    bound = 1.0 / jnp.sqrt(fan_in)
    # Stored as (fan_in, fan_out) = transpose of PyTorch's (out, in) weight.
    w = jax.random.uniform(kw, (fan_in, fan_out), dtype, -bound, bound)
    b = jax.random.uniform(kb, (fan_out,), dtype, -bound, bound)
    return w, b


if __name__ == "__main__":
    ninputs, nhidden, noutputs = 32, 64, 16
    batch = 8

    key = jax.random.PRNGKey(0)
    kx, k1, k2 = jax.random.split(key, 3)

    x = jax.random.normal(kx, (batch, ninputs), jnp.float32)
    w1, b1 = _init_linear(k1, ninputs, nhidden)
    w2, b2 = _init_linear(k2, nhidden, noutputs)

    forward = make_mlp(w1, b1, w2, b2)
    out = jax.block_until_ready(forward(x))

    # Reference check in plain JAX f32 (same math as the PyTorch forward).
    ref = jnp.maximum(x @ w1 + b1, 0.0) @ w2 + b2
    assert out.shape == (batch, noutputs), out.shape
    assert out.dtype == x.dtype, out.dtype
    max_err = float(jnp.max(jnp.abs(out.astype(jnp.float32) - ref)))
    # bf16 matmul operands vs f32 reference -> loose tolerance.
    assert max_err < 5e-2, f"max abs err {max_err}"

    print("KERNEL_OK")
</pallas_src>

<mosaic_0001>
module attributes {stable_mosaic.version = 11 : i64} {
  func.func @mlp_kernel(%arg0: i32, %arg1: i32, %arg2: memref<16x128xbf16, #tpu.memory_space<vmem>>, %arg3: memref<128x128xbf16, #tpu.memory_space<vmem>>, %arg4: memref<1x128xbf16, #tpu.memory_space<vmem>>, %arg5: memref<128x128xbf16, #tpu.memory_space<vmem>>, %arg6: memref<1x128xf32, #tpu.memory_space<vmem>>, %arg7: memref<16x128xf32, #tpu.memory_space<vmem>>, %arg8: memref<16x128xf32, #tpu.memory_space<vmem>>) attributes {dimension_semantics = [#tpu.dimension_semantics<parallel>, #tpu.dimension_semantics<arbitrary>], iteration_bounds = array<i64: 1, 1>, scalar_prefetch = 0 : i64, scratch_operands = 1 : i64, tpu.core_type = #tpu.core_type<tc>, window_params = [{transform_indices = @transform_0, window_bounds = array<i64: 16, 128>}, {transform_indices = @transform_1, window_bounds = array<i64: 128, 128>}, {transform_indices = @transform_2, window_bounds = array<i64: 1, 128>}, {transform_indices = @transform_3, window_bounds = array<i64: 128, 128>}, {pipeline_mode = #tpu.pipeline_mode<synchronous>, transform_indices = @transform_4, window_bounds = array<i64: 1, 128>}, {transform_indices = @transform_5, window_bounds = array<i64: 16, 128>}]} {
    %c0_i32 = arith.constant 0 : i32
    %0 = arith.cmpi eq, %arg1, %c0_i32 : i32
    %1 = arith.extui %0 : i1 to i32
    %c0_i32_0 = arith.constant 0 : i32
    %2 = arith.cmpi ne, %1, %c0_i32_0 : i32
    scf.if %2 {
      %cst_16 = arith.constant 0.000000e+00 : f32
      %20 = vector.broadcast %cst_16 : f32 to vector<16x128xf32>
      %c0_17 = arith.constant 0 : index
      %c0_18 = arith.constant 0 : index
      %21 = vector.load %arg8[%c0_17, %c0_18] : memref<16x128xf32, #tpu.memory_space<vmem>>, vector<16x128xf32>
      tpu.vector_store %arg8[%c0_17, %c0_18], %20 {strides = array<i32>} : memref<16x128xf32, #tpu.memory_space<vmem>>, vector<16x128xf32>,
    } else {
    }
    %c0 = arith.constant 0 : index
    %c0_1 = arith.constant 0 : index
    %3 = vector.load %arg2[%c0, %c0_1] : memref<16x128xbf16, #tpu.memory_space<vmem>>, vector<16x128xbf16>
    %c0_2 = arith.constant 0 : index
    %c0_3 = arith.constant 0 : index
    %4 = vector.load %arg3[%c0_2, %c0_3] : memref<128x128xbf16, #tpu.memory_space<vmem>>, vector<128x128xbf16>
    %cst = arith.constant dense<0.000000e+00> : vector<16x128xf32>
    %5 = tpu.matmul %3, %4, %cst {dimension_numbers = #tpu.dot_dimension_numbers<[1], [0], [0], [1], [0, 0, 1, 1], [], []>} : vector<16x128xbf16>, vector<128x128xbf16>, vector<16x128xf32> -> vector<16x128xf32>
    %6 = arith.truncf %5 : vector<16x128xf32> to vector<16x128xbf16>
    %c0_4 = arith.constant 0 : index
    %c0_5 = arith.constant 0 : index
    %7 = vector.load %arg4[%c0_4, %c0_5] : memref<1x128xbf16, #tpu.memory_space<vmem>>, vector<1x128xbf16>
    %8 = vector.broadcast %7 : vector<1x128xbf16> to vector<16x128xbf16>
    %9 = arith.addf %6, %8 : vector<16x128xbf16>
    %cst_6 = arith.constant 0.000000e+00 : bf16
    %10 = vector.broadcast %cst_6 : bf16 to vector<16x128xbf16>
    %11 = arith.maximumf %9, %10 : vector<16x128xbf16>
    %c0_7 = arith.constant 0 : index
    %c0_8 = arith.constant 0 : index
    %12 = vector.load %arg8[%c0_7, %c0_8] : memref<16x128xf32, #tpu.memory_space<vmem>>, vector<16x128xf32>
    %c0_9 = arith.constant 0 : index
    %c0_10 = arith.constant 0 : index
    %13 = vector.load %arg5[%c0_9, %c0_10] : memref<128x128xbf16, #tpu.memory_space<vmem>>, vector<128x128xbf16>
    %cst_11 = arith.constant dense<0.000000e+00> : vector<16x128xf32>
    %14 = tpu.matmul %11, %13, %cst_11 {dimension_numbers = #tpu.dot_dimension_numbers<[1], [0], [0], [1], [0, 0, 1, 1], [], []>} : vector<16x128xbf16>, vector<128x128xbf16>, vector<16x128xf32> -> vector<16x128xf32>
    %15 = arith.addf %12, %14 : vector<16x128xf32>
    %c0_12 = arith.constant 0 : index
    %c0_13 = arith.constant 0 : index
    %16 = vector.load %arg8[%c0_12, %c0_13] : memref<16x128xf32, #tpu.memory_space<vmem>>, vector<16x128xf32>
    tpu.vector_store %arg8[%c0_12, %c0_13], %15 {strides = array<i32>} : memref<16x128xf32, #tpu.memory_space<vmem>>, vector<16x128xf32>,
    %c0_i32_14 = arith.constant 0 : i32
    %17 = arith.cmpi eq, %arg1, %c0_i32_14 : i32
    %18 = arith.extui %17 : i1 to i32
    %c0_i32_15 = arith.constant 0 : i32
    %19 = arith.cmpi ne, %18, %c0_i32_15 : i32
    scf.if %19 {
      %c0_16 = arith.constant 0 : index
      %c0_17 = arith.constant 0 : index
      %20 = vector.load %arg8[%c0_16, %c0_17] : memref<16x128xf32, #tpu.memory_space<vmem>>, vector<16x128xf32>
      %c0_18 = arith.constant 0 : index
      %c0_19 = arith.constant 0 : index
      %21 = vector.load %arg6[%c0_18, %c0_19] : memref<1x128xf32, #tpu.memory_space<vmem>>, vector<1x128xf32>
      %22 = vector.broadcast %21 : vector<1x128xf32> to vector<16x128xf32>
      %23 = arith.addf %20, %22 : vector<16x128xf32>
      %c0_20 = arith.constant 0 : index
      %c0_21 = arith.constant 0 : index
      %24 = vector.load %arg7[%c0_20, %c0_21] : memref<16x128xf32, #tpu.memory_space<vmem>>, vector<16x128xf32>
      tpu.vector_store %arg7[%c0_20, %c0_21], %23 {strides = array<i32>} : memref<16x128xf32, #tpu.memory_space<vmem>>, vector<16x128xf32>,
    } else {
    }
    return
  }
  func.func @transform_0(%arg0: i32, %arg1: i32) -> (i32, i32) {
    %c0_i32 = arith.constant 0 : i32
    %c0_i32_0 = arith.constant 0 : i32
    return %arg0, %c0_i32 : i32, i32
  }
  func.func @transform_1(%arg0: i32, %arg1: i32) -> (i32, i32) {
    %c0_i32 = arith.constant 0 : i32
    %c0_i32_0 = arith.constant 0 : i32
    return %c0_i32, %arg1 : i32, i32
  }
  func.func @transform_2(%arg0: i32, %arg1: i32) -> (i32, i32) {
    %c0_i32 = arith.constant 0 : i32
    %c0_i32_0 = arith.constant 0 : i32
    return %c0_i32, %arg1 : i32, i32
  }
  func.func @transform_3(%arg0: i32, %arg1: i32) -> (i32, i32) {
    %c0_i32 = arith.constant 0 : i32
    %c0_i32_0 = arith.constant 0 : i32
    return %arg1, %c0_i32 : i32, i32
  }
  func.func @transform_4(%arg0: i32, %arg1: i32) -> (i32, i32) {
    %c0_i32 = arith.constant 0 : i32
    %c0_i32_0 = arith.constant 0 : i32
    %c0_i32_1 = arith.constant 0 : i32
    return %c0_i32, %c0_i32_0 : i32, i32
  }
  func.func @transform_5(%arg0: i32, %arg1: i32) -> (i32, i32) {
    %c0_i32 = arith.constant 0 : i32
    %c0_i32_0 = arith.constant 0 : i32
    return %arg0, %c0_i32 : i32, i32
  }
}

</mosaic_0001>

<llo_original>
// kernel: fwd.1
$region0: #{fwd.1}
  #allocation0 [shape = 'u32[]', space=smem, size = 0x4, offset = 0x4, fixed_abs, tag = 'smem constant byte address 0x4 - core index']
  #allocation1 [shape = 'u32[144,128]{1,0:T(1,128)}', space=vmem, size = 0x12000, scoped, tag = 'internal scratch']
  #allocation2 [shape = 'f32[16,128]{1,0:T(8,128)}', space=vmem, size = 0x2000, scoped, tag = 'scratch operand']
  %s0 = inlined_call_operand.vmem [shape: bf16[16,128], index: 0, kind: input, shape index: {}]
  %s1 = inlined_call_operand.hbm [shape: bf16[128,128], index: 1, kind: input, shape index: {}]
  %s2 = inlined_call_operand.vmem [shape: bf16[1,128], index: 2, kind: input, shape index: {}]
  %s3 = inlined_call_operand.hbm [shape: bf16[128,128], index: 3, kind: input, shape index: {}]
  %s4 = inlined_call_operand.vmem [shape: f32[1,128], index: 4, kind: input, shape index: {}]
  %s5 = inlined_call_operand.vmem [shape: f32[16,128], index: 5, kind: output, shape index: {}]
  %s6 = sld [smem:[#allocation0]]
  $region46: #{fwd.1} parent=0
    _
  %s8 = ssub.s32 1, %s6
  %s9 = scalar_select 0, %s8, %s6
  $region1: #{fwd.1} parent=0
    #allocation3 [shape = 'u8[32768]{0}', space=vmem, size = 0x8000, scoped, tag = 'input window, operand 1, single buffered']
    #allocation4 [shape = 's32[1]{0}', space=sflag, size = 0x4, scoped, tag = 'scoped memory for fwd.1']
    #allocation5 [shape = 'u8[32768]{0}', space=vmem, size = 0x8000, scoped, tag = 'input window, operand 3, single buffered']
    #allocation6 [shape = 's32[1]{0}', space=sflag, size = 0x4, scoped, tag = 'scoped memory for fwd.1']
    %10 = vsyncpa [#allocation4], 0
    %11 = vsyncpa [#allocation6], 0
    // Predicated region
    $region2: #{fwd.1} parent=1 // pred_check
      _
    $region3: #{fwd.1} parent=1 // pred_check_branch
      %13 = sbr.rel (0) target = $region5
    $region4: #{fwd.1} parent=1 // pred_region
      _
    $region5: #{fwd.1} parent=1 // pred_fallthru
      _
    // Predicated region
    $region6: #{fwd.1} parent=1 // pred_check
      _
    $region7: #{fwd.1} parent=1 // pred_check_branch
      %15 = sbr.rel (0) target = $region9
    $region8: #{fwd.1} parent=1 // pred_region
      %s17 = ssub.s32 1024, 1024
      %18 = vsyncadd [#allocation4], %s17
      %s19 = sshll.u32 [#allocation3], 4
      %s20 = int_to_ptr.vmem [resolvable:$true] %s19
      %25 = dma.hbm_to_vmem [thread:$0]  %s1, 1024, %s20, [#allocation4], 64, 64, 4
    $region9: #{fwd.1} parent=1 // pred_fallthru
      _
    // Predicated region
    $region10: #{fwd.1} parent=1 // pred_check
      _
    $region11: #{fwd.1} parent=1 // pred_check_branch
      %27 = sbr.rel (0) target = $region13
    $region12: #{fwd.1} parent=1 // pred_region
      _
    $region13: #{fwd.1} parent=1 // pred_fallthru
      _
    // Predicated region
    $region14: #{fwd.1} parent=1 // pred_check
      _
    $region15: #{fwd.1} parent=1 // pred_check_branch
      %29 = sbr.rel (0) target = $region17
    $region16: #{fwd.1} parent=1 // pred_region
      %s31 = ssub.s32 1024, 1024
      %32 = vsyncadd [#allocation6], %s31
      %s33 = sshll.u32 [#allocation5], 4
      %s34 = int_to_ptr.vmem [resolvable:$true] %s33
      %39 = dma.hbm_to_vmem [thread:$0]  %s3, 1024, %s34, [#allocation6], 64, 64, 4
    $region17: #{fwd.1} parent=1 // pred_fallthru
      _
    // Predicated region
    $region18: #{fwd.1} parent=1 // pred_check
      _
    $region19: #{fwd.1} parent=1 // pred_check_branch
      %41 = sbr.rel (0) target = $region21
    $region20: #{fwd.1} parent=1 // pred_region
      _
    $region21: #{fwd.1} parent=1 // pred_fallthru
      _
    // Predicated region
    $region22: #{fwd.1} parent=1 // pred_check
      _
    $region23: #{fwd.1} parent=1 // pred_check_branch
      %43 = sbr.rel (0) target = $region25
    $region24: #{fwd.1} parent=1 // pred_region
      %44 = dma.done [#allocation4], 1024
    $region25: #{fwd.1} parent=1 // pred_fallthru
      _
    // Predicated region
    $region26: #{fwd.1} parent=1 // pred_check
      _
    $region27: #{fwd.1} parent=1 // pred_check_branch
      %46 = sbr.rel (0) target = $region29
    $region28: #{fwd.1} parent=1 // pred_region
      %47 = dma.done [#allocation6], 1024
    $region29: #{fwd.1} parent=1 // pred_fallthru
      _
    %p49 = scmp.eq.s32.totalorder 0, 0
    // Predicated region
    $region30: #{fwd.1} parent=1 // pred_check
      %p50 = pneg %p49
    $region31: #{fwd.1} parent=1 // pred_check_branch
      %52 = sbr.rel (%p50) target = $region33
    $region32: #{fwd.1} parent=1 // pred_region
      %53 = vst [vmem:[#allocation2] sm:$0xff] 0.0
      %54 = vst [vmem:[#allocation2 + $0x8] sm:$0xff] 0.0
    $region33: #{fwd.1} parent=1 // pred_fallthru
      _
    %v55 = vld [vmem:[%s0] sm:$0xf]
    %v56 = vld [vmem:[%s0 + $0x4] sm:$0xf]
    %v57 = vld [vmem:[#allocation3] sm:$0xf]
    %v58 = vld [vmem:[#allocation3 + $0x4] sm:$0xf]
    %v59 = vld [vmem:[#allocation3 + $0x8] sm:$0xf]
    %v60 = vld [vmem:[#allocation3 + $0xc] sm:$0xf]
    %v61 = vld [vmem:[#allocation3 + $0x10] sm:$0xf]
    %v62 = vld [vmem:[#allocation3 + $0x14] sm:$0xf]
    %v63 = vld [vmem:[#allocation3 + $0x18] sm:$0xf]
    %v64 = vld [vmem:[#allocation3 + $0x1c] sm:$0xf]
    %v65 = vld [vmem:[#allocation3 + $0x20] sm:$0xf]
    %v66 = vld [vmem:[#allocation3 + $0x24] sm:$0xf]
    %v67 = vld [vmem:[#allocation3 + $0x28] sm:$0xf]
    %v68 = vld [vmem:[#allocation3 + $0x2c] sm:$0xf]
    %v69 = vld [vmem:[#allocation3 + $0x30] sm:$0xf]
    %v70 = vld [vmem:[#allocation3 + $0x34] sm:$0xf]
    %v71 = vld [vmem:[#allocation3 + $0x38] sm:$0xf]
    %v72 = vld [vmem:[#allocation3 + $0x3c] sm:$0xf]
    %v75 = vunpack.c.l.b16 %v55
    %v76 = vunpack.c.l.b16 %v56
    %v77 = vpack.c.b16 %v76, %v75
    %v95 = vunpack.c.l.b16 %v57
    %v96 = vunpack.c.l.b16 %v58
    %v97 = vunpack.c.l.b16 %v59
    %v98 = vunpack.c.l.b16 %v60
    %v99 = vunpack.c.l.b16 %v61
    %v100 = vunpack.c.l.b16 %v62
    %v101 = vunpack.c.l.b16 %v63
    %v102 = vunpack.c.l.b16 %v64
    %v103 = vunpack.c.l.b16 %v65
    %v104 = vunpack.c.l.b16 %v66
    %v105 = vunpack.c.l.b16 %v67
    %v106 = vunpack.c.l.b16 %v68
    %v107 = vunpack.c.l.b16 %v69
    %v108 = vunpack.c.l.b16 %v70
    %v109 = vunpack.c.l.b16 %v71
    %v110 = vunpack.c.l.b16 %v72
    %v111 = vpack.c.b16 %v96, %v95
    %v112 = vpack.c.b16 %v98, %v97
    %v113 = vpack.c.b16 %v100, %v99
    %v114 = vpack.c.b16 %v102, %v101
    %v115 = vpack.c.b16 %v104, %v103
    %v116 = vpack.c.b16 %v106, %v105
    %v117 = vpack.c.b16 %v108, %v107
    %v118 = vpack.c.b16 %v110, %v109
    %127 = vmatprep.subr.bf16.mxu0 0
    %128 = vmatpush1.bf16.msra.mxu0 %v111
    %129 = vmatprep.subr.bf16.mxu0 0
    %130 = vmatpush1.bf16.msra.mxu0 %v112
    %131 = vmatprep.subr.bf16.mxu0 0
    %132 = vmatpush1.bf16.msra.mxu0 %v113
    %133 = vmatprep.subr.bf16.mxu0 0
    %134 = vmatpush1.bf16.msra.mxu0 %v114
    %135 = vmatprep.subr.bf16.mxu0 0
    %136 = vmatpush1.bf16.msra.mxu0 %v115
    %137 = vmatprep.subr.bf16.mxu0 0
    %138 = vmatpush1.bf16.msra.mxu0 %v116
    %139 = vmatprep.subr.bf16.mxu0 0
    %140 = vmatpush1.bf16.msra.mxu0 %v117
    %141 = vmatprep.subr.bf16.mxu0 0
    %142 = vmatpush1.bf16.msra.mxu0 %v118
    %143 = vmatprep.subr.bf16.mxu0 0
    %144 = vmatpush1.bf16.msra.mxu0 0
    %145 = vmatprep.subr.bf16.mxu0 0
    %146 = vmatpush1.bf16.msra.mxu0 0
    %147 = vmatprep.subr.bf16.mxu0 0
    %148 = vmatpush1.bf16.msra.mxu0 0
    %149 = vmatprep.subr.bf16.mxu0 0
    %150 = vmatpush1.bf16.msra.mxu0 0
    %151 = vmatprep.subr.bf16.mxu0 0
    %152 = vmatpush1.bf16.msra.mxu0 0
    %153 = vmatprep.subr.bf16.mxu0 0
    %154 = vmatpush1.bf16.msra.mxu0 0
    %155 = vmatprep.subr.bf16.mxu0 0
    %156 = vmatpush1.bf16.msra.mxu0 0
    %157 = vmatprep.subr.bf16.mxu0 0
    %158 = vmatpush1.bf16.msra.mxu0 0
    %159 = vmatprep.mubr.bf16.mxu0 0
    %160 = vmatmul.mubr.bf16.gmra.mrb[0].mxu0 %v77
    %v161 = vpop.f32.mrb[0].mxu0
    %v162 = vadd.f32 0.0, %v161
    %v163 = vpop.f32.mrb[0].mxu0
    %v164 = vpop.f32.mrb[0].mxu0
    %v165 = vadd.f32 0.0, %v164
    %v166 = vpop.f32.mrb[0].mxu0
    %167 = vdwg.mxu0
    %v168 = vpack.c.bf16 %v165, %v162
    %v169 = vld [vmem:[%s2] sm:$0x1]
    %v171 = vpack.i.b16 %v169, %v169
    %v173 = vlaneseq
    %v174 = vshrl.u32 %v173, 7
    %v175 = vsub.s32 0, %v174
    %v176 = vrot.slane %v171, %v175
    %v177 = vadd.bf16 %v168, %v176
    %v178 = vmax.bf16 %v177, 0
    %v179 = vld [vmem:[#allocation2] sm:$0xff]
    %v180 = vld [vmem:[#allocation2 + $0x8] sm:$0xff]
    %v181 = vld [vmem:[#allocation5] sm:$0xf]
    %v182 = vld [vmem:[#allocation5 + $0x4] sm:$0xf]
    %v183 = vld [vmem:[#allocation5 + $0x8] sm:$0xf]
    %v184 = vld [vmem:[#allocation5 + $0xc] sm:$0xf]
    %v185 = vld [vmem:[#allocation5 + $0x10] sm:$0xf]
    %v186 = vld [vmem:[#allocation5 + $0x14] sm:$0xf]
    %v187 = vld [vmem:[#allocation5 + $0x18] sm:$0xf]
    %v188 = vld [vmem:[#allocation5 + $0x1c] sm:$0xf]
    %v189 = vld [vmem:[#allocation5 + $0x20] sm:$0xf]
    %v190 = vld [vmem:[#allocation5 + $0x24] sm:$0xf]
    %v191 = vld [vmem:[#allocation5 + $0x28] sm:$0xf]
    %v192 = vld [vmem:[#allocation5 + $0x2c] sm:$0xf]
    %v193 = vld [vmem:[#allocation5 + $0x30] sm:$0xf]
    %v194 = vld [vmem:[#allocation5 + $0x34] sm:$0xf]
    %v195 = vld [vmem:[#allocation5 + $0x38] sm:$0xf]
    %v196 = vld [vmem:[#allocation5 + $0x3c] sm:$0xf]
    %v213 = vunpack.c.l.b16 %v181
    %v214 = vunpack.c.l.b16 %v182
    %v215 = vunpack.c.l.b16 %v183
    %v216 = vunpack.c.l.b16 %v184
    %v217 = vunpack.c.l.b16 %v185
    %v218 = vunpack.c.l.b16 %v186
    %v219 = vunpack.c.l.b16 %v187
    %v220 = vunpack.c.l.b16 %v188
    %v221 = vunpack.c.l.b16 %v189
    %v222 = vunpack.c.l.b16 %v190
    %v223 = vunpack.c.l.b16 %v191
    %v224 = vunpack.c.l.b16 %v192
    %v225 = vunpack.c.l.b16 %v193
    %v226 = vunpack.c.l.b16 %v194
    %v227 = vunpack.c.l.b16 %v195
    %v228 = vunpack.c.l.b16 %v196
    %v229 = vpack.c.b16 %v214, %v213
    %v230 = vpack.c.b16 %v216, %v215
    %v231 = vpack.c.b16 %v218, %v217
    %v232 = vpack.c.b16 %v220, %v219
    %v233 = vpack.c.b16 %v222, %v221
    %v234 = vpack.c.b16 %v224, %v223
    %v235 = vpack.c.b16 %v226, %v225
    %v236 = vpack.c.b16 %v228, %v227
    %245 = vmatprep.subr.bf16.mxu0 0
    %246 = vmatpush1.bf16.msra.mxu0 %v229
    %247 = vmatprep.subr.bf16.mxu0 0
    %248 = vmatpush1.bf16.msra.mxu0 %v230
    %249 = vmatprep.subr.bf16.mxu0 0
    %250 = vmatpush1.bf16.msra.mxu0 %v231
    %251 = vmatprep.subr.bf16.mxu0 0
    %252 = vmatpush1.bf16.msra.mxu0 %v232
    %253 = vmatprep.subr.bf16.mxu0 0
    %254 = vmatpush1.bf16.msra.mxu0 %v233
    %255 = vmatprep.subr.bf16.mxu0 0
    %256 = vmatpush1.bf16.msra.mxu0 %v234
    %257 = vmatprep.subr.bf16.mxu0 0
    %258 = vmatpush1.bf16.msra.mxu0 %v235
    %259 = vmatprep.subr.bf16.mxu0 0
    %260 = vmatpush1.bf16.msra.mxu0 %v236
    %261 = vmatprep.subr.bf16.mxu0 0
    %262 = vmatpush1.bf16.msra.mxu0 0
    %263 = vmatprep.subr.bf16.mxu0 0
    %264 = vmatpush1.bf16.msra.mxu0 0
    %265 = vmatprep.subr.bf16.mxu0 0
    %266 = vmatpush1.bf16.msra.mxu0 0
    %267 = vmatprep.subr.bf16.mxu0 0
    %268 = vmatpush1.bf16.msra.mxu0 0
    %269 = vmatprep.subr.bf16.mxu0 0
    %270 = vmatpush1.bf16.msra.mxu0 0
    %271 = vmatprep.subr.bf16.mxu0 0
    %272 = vmatpush1.bf16.msra.mxu0 0
    %273 = vmatprep.subr.bf16.mxu0 0
    %274 = vmatpush1.bf16.msra.mxu0 0
    %275 = vmatprep.subr.bf16.mxu0 0
    %276 = vmatpush1.bf16.msra.mxu0 0
    %277 = vmatprep.mubr.bf16.mxu0 0
    %278 = vmatmul.mubr.bf16.gmra.mrb[0].mxu0 %v178
    %v279 = vpop.f32.mrb[0].mxu0
    %v280 = vadd.f32 0.0, %v279
    %v281 = vpop.f32.mrb[0].mxu0
    %v282 = vpop.f32.mrb[0].mxu0
    %v283 = vadd.f32 0.0, %v282
    %v284 = vpop.f32.mrb[0].mxu0
    %285 = vdwg.mxu0
    %v286 = vadd.f32 %v179, %v280
    %v287 = vadd.f32 %v180, %v283
    %288 = vst [vmem:[#allocation2] sm:$0xff] %v286
    %289 = vst [vmem:[#allocation2 + $0x8] sm:$0xff] %v287
    // Predicated region
    $region34: #{fwd.1} parent=1 // pred_check
      %p290 = pneg %p49
    $region35: #{fwd.1} parent=1 // pred_check_branch
      %292 = sbr.rel (%p290) target = $region37
    $region36: #{fwd.1} parent=1 // pred_region
      %v293 = vld [vmem:[#allocation2] sm:$0xff]
      %v294 = vld [vmem:[#allocation2 + $0x8] sm:$0xff]
      %v295 = vld [vmem:[%s4] sm:$0x1]
      %v297 = vlaneseq
      %v298 = vshrl.u32 %v297, 7
      %v299 = vsub.s32 0, %v298
      %v300 = vrot.slane %v295, %v299
      %v302 = vadd.f32 %v293, %v300
      %v303 = vadd.f32 %v294, %v300
      %304 = vst [vmem:[%s5] sm:$0xff] %v302
      %305 = vst [vmem:[%s5 + $0x8] sm:$0xff] %v303
    $region37: #{fwd.1} parent=1 // pred_fallthru
      _
    // Predicated region
    $region38: #{fwd.1} parent=1 // pred_check
      _
    $region39: #{fwd.1} parent=1 // pred_check_branch
      %307 = sbr.rel (0) target = $region41
    $region40: #{fwd.1} parent=1 // pred_region
      _
    $region41: #{fwd.1} parent=1 // pred_fallthru
      _
    // Predicated region
    $region42: #{fwd.1} parent=1 // pred_check
      _
    $region43: #{fwd.1} parent=1 // pred_check_branch
      %309 = sbr.rel (0) target = $region45
    $region44: #{fwd.1} parent=1 // pred_region
      _
    $region45: #{fwd.1} parent=1 // pred_fallthru
      _
    %310 = vsyncpa [#allocation4], 1
    %311 = vsyncpa [#allocation6], 1

</llo_original>
